<compile_context>
chip_gen: v5e
topology: v5e:2x2
jax: 0.10.0
libtpu: 0.0.40
codegen_flags: <defaults>
</compile_context>

<pallas_src>
import functools

import jax
import jax.numpy as jnp
from jax.experimental import pallas as pl
from jax.experimental.pallas import tpu as pltpu


def _round_up(a, b):
    return (a + b - 1) // b * b


def _lrelu(v, slope=0.2):
    return jnp.where(v > 0, v, slope * v)


def transgcn_kernel(adj_ref, xk_ref, xi_ref, wg1_ref, wg2_ref, wb1_ref, wb2_ref,
                    r_ref, wgc_ref, hk_ref, out_ref,
                    agg_ref, rl1_ref, rsum_ref, *, head):
    """Grid = (row tiles, adj column tiles). Accumulate agg = adj @ x and the adj
    row sums across column tiles; finalize Relation + GraphConvolution on the
    last column tile."""
    eps = 1e-12
    k = pl.program_id(1)
    nk = pl.num_programs(1)

    @pl.when(k == 0)
    def _():
        agg_ref[...] = jnp.zeros_like(agg_ref)
        rl1_ref[...] = jnp.zeros_like(rl1_ref)
        rsum_ref[...] = jnp.zeros_like(rsum_ref)

    # adj streamed as bf16 (exact for 0/1 adjacency), upcast for f32 accumulate.
    adj_blk = adj_ref[...].astype(jnp.float32)                    # (tm, tk)
    agg_ref[...] += jnp.dot(adj_blk, xk_ref[...],
                            preferred_element_type=jnp.float32)   # (tm, F)
    rl1_ref[...] += jnp.sum(jnp.abs(adj_blk), axis=1, keepdims=True)
    if not head:
        rsum_ref[...] += jnp.sum(adj_blk, axis=1, keepdims=True)

    @pl.when(k == nk - 1)
    def _():
        x = xi_ref[...]                                           # (tm, F)
        agg = agg_ref[...]                                        # adj @ x
        row_l1 = rl1_ref[...]                                     # (tm, 1)

        # neighbor = L1-row-normalized(adj) @ x  ==  (adj @ x) / rowL1(adj)
        inv_l1 = 1.0 / jnp.maximum(row_l1, eps)
        neighbor = agg * inv_l1

        # Relation (ver=1, ablation=0)
        gamma = _lrelu(
            jnp.dot(x, wg1_ref[...], preferred_element_type=jnp.float32)
            + jnp.dot(neighbor, wg2_ref[...], preferred_element_type=jnp.float32)
        ) + 1.0
        beta = _lrelu(
            jnp.dot(x, wb1_ref[...], preferred_element_type=jnp.float32)
            + jnp.dot(neighbor, wb2_ref[...], preferred_element_type=jnp.float32)
        )
        output = x + (gamma * r_ref[...] + beta) - neighbor
        out_ref[...] = output

        # GraphConvolution with adj_I = adj + I, never materialized:
        #   adj_I @ (x @ W) == (adj @ x + x) @ W == (agg + x) @ W
        #   rowsum(|adj_I|) == rowL1(adj) + 1      (adj >= 0)
        w = wgc_ref[...]                                          # (F, H)
        if head:
            inv_rs = 1.0 / jnp.maximum(row_l1 + 1.0, eps)
            hk = jnp.dot(agg + x, w, preferred_element_type=jnp.float32) * inv_rs
        else:
            # ablation=0 => h_s = output (Generator not used on this path)
            num_neighbor = rsum_ref[...] + 1.0                    # rowsum(adj_I)
            inv_den = 1.0 / (num_neighbor + 1.0)
            hk = jnp.dot(agg + x + output, w,
                         preferred_element_type=jnp.float32) * inv_den
        hk_ref[...] = hk.astype(hk_ref.dtype)


def transgcn_forward(x, adj, params, head, *,
                     max_tm=256, max_tk=512, adj_dtype=jnp.bfloat16):
    """Padded + tiled TransGCN forward.

    adj_dtype=bf16 halves adjacency bandwidth and is exact for 0/1 adjacency;
    pass jnp.float32 for weighted adjacency matrices.
    """
    n, nfeat = x.shape
    nhid = params["w_gc"].shape[1]

    # Lane-pad feature/hidden dims; tile nodes (rows) and adj columns.
    f_pad = _round_up(nfeat, 128)
    h_pad = _round_up(nhid, 128)
    tm = min(max_tm, _round_up(n, 8))
    tk = min(max_tk, _round_up(n, 128))
    n_rows = _round_up(n, tm)
    n_cols = _round_up(n, tk)
    n_x = max(n_rows, n_cols)

    def pad2(a, rows, cols):
        return jnp.zeros((rows, cols), jnp.float32).at[
            : a.shape[0], : a.shape[1]].set(a.astype(jnp.float32))

    x_pad = pad2(x, n_x, f_pad)
    adj_pad = jnp.zeros((n_rows, n_cols), adj_dtype).at[:n, :n].set(
        adj.astype(adj_dtype))
    wg1 = pad2(params["wg1"], f_pad, f_pad)
    wg2 = pad2(params["wg2"], f_pad, f_pad)
    wb1 = pad2(params["wb1"], f_pad, f_pad)
    wb2 = pad2(params["wb2"], f_pad, f_pad)
    r = pad2(params["r"], 1, f_pad)
    wgc = pad2(params["w_gc"], f_pad, h_pad)

    grid = (n_rows // tm, n_cols // tk)
    kernel = functools.partial(transgcn_kernel, head=head)

    flops = int(2 * n_rows * n_cols * f_pad            # adj @ x
                + 4 * 2 * n_rows * f_pad * f_pad       # relation matmuls
                + 2 * n_rows * f_pad * h_pad)          # (.) @ w_gc
    adj_bytes = adj_pad.size * jnp.dtype(adj_dtype).itemsize
    bytes_accessed = int(adj_bytes + 2 * x_pad.size * 4
                         + 4 * wg1.size * 4 + wgc.size * 4 + r.size * 4
                         + (n_rows * h_pad + n_rows * f_pad) * 4)

    hk, out = pl.pallas_call(
        kernel,
        out_shape=(jax.ShapeDtypeStruct((n_rows, h_pad), jnp.float32),
                   jax.ShapeDtypeStruct((n_rows, f_pad), jnp.float32)),
        grid_spec=pltpu.PrefetchScalarGridSpec(
            num_scalar_prefetch=0,
            grid=grid,
            in_specs=[
                pl.BlockSpec((tm, tk), lambda i, k: (i, k)),        # adj tile
                pl.BlockSpec((tk, f_pad), lambda i, k: (k, 0)),     # x (column role)
                pl.BlockSpec((tm, f_pad), lambda i, k: (i, 0)),     # x (row role)
                pl.BlockSpec((f_pad, f_pad), lambda i, k: (0, 0)),  # wg1
                pl.BlockSpec((f_pad, f_pad), lambda i, k: (0, 0)),  # wg2
                pl.BlockSpec((f_pad, f_pad), lambda i, k: (0, 0)),  # wb1
                pl.BlockSpec((f_pad, f_pad), lambda i, k: (0, 0)),  # wb2
                pl.BlockSpec((1, f_pad), lambda i, k: (0, 0)),      # r
                pl.BlockSpec((f_pad, h_pad), lambda i, k: (0, 0)),  # w_gc
            ],
            out_specs=(
                pl.BlockSpec((tm, h_pad), lambda i, k: (i, 0)),     # h_k
                pl.BlockSpec((tm, f_pad), lambda i, k: (i, 0)),     # output
            ),
            scratch_shapes=[
                pltpu.VMEM((tm, f_pad), jnp.float32),   # agg accumulator
                pltpu.VMEM((tm, 1), jnp.float32),       # rowsum(|adj|)
                pltpu.VMEM((tm, 1), jnp.float32),       # rowsum(adj)
            ],
        ),
        compiler_params=pltpu.CompilerParams(
            dimension_semantics=("parallel", "arbitrary"),
            vmem_limit_bytes=32 * 1024 * 1024,
        ),
        cost_estimate=pl.CostEstimate(flops=flops, transcendentals=0,
                                      bytes_accessed=bytes_accessed),
    )(adj_pad, x_pad, x_pad, wg1, wg2, wb1, wb2, r, wgc)

    return hk[:n, :nhid], out[:n, :nfeat]


def transgcn_ref(x, adj, params, head):
    """Pure-JAX reference (mirrors the PyTorch module, ver=1, ablation=0)."""
    eps = 1e-12
    mean = adj / jnp.maximum(jnp.sum(jnp.abs(adj), axis=1, keepdims=True), eps)
    neighbor = mean @ x
    lrelu = lambda v: jnp.where(v > 0, v, 0.2 * v)
    gamma = lrelu(x @ params["wg1"] + neighbor @ params["wg2"]) + 1.0
    beta = lrelu(x @ params["wb1"] + neighbor @ params["wb2"])
    output = x + (gamma * params["r"] + beta) - neighbor
    adj_i = adj + jnp.eye(adj.shape[0], dtype=adj.dtype)
    w = params["w_gc"]
    if head:
        norm = adj_i / jnp.maximum(jnp.sum(jnp.abs(adj_i), axis=1, keepdims=True), eps)
        hk = norm @ (x @ w)
    else:
        hk = (adj_i @ (x @ w) + output @ w) / (jnp.sum(adj_i, axis=1, keepdims=True) + 1.0)
    return hk, output


def _make_inputs(n, nfeat, nhid, key):
    keys = jax.random.split(key, 8)
    x = jax.random.normal(keys[0], (n, nfeat), jnp.float32)
    adj = (jax.random.uniform(keys[1], (n, n), jnp.float32) > 0.5).astype(jnp.float32)
    stdv_feat = 1.0 / (nfeat ** 0.5)   # nn.Linear(nfeat, nfeat) / Relation.r
    stdv_gc = 1.0 / (nhid ** 0.5)      # GraphConvolution weight
    params = {
        "wg1": jax.random.uniform(keys[2], (nfeat, nfeat), jnp.float32, -stdv_feat, stdv_feat),
        "wg2": jax.random.uniform(keys[3], (nfeat, nfeat), jnp.float32, -stdv_feat, stdv_feat),
        "wb1": jax.random.uniform(keys[4], (nfeat, nfeat), jnp.float32, -stdv_feat, stdv_feat),
        "wb2": jax.random.uniform(keys[5], (nfeat, nfeat), jnp.float32, -stdv_feat, stdv_feat),
        "r":   jax.random.uniform(keys[6], (1, nfeat), jnp.float32, -stdv_feat, stdv_feat),
        "w_gc": jax.random.uniform(keys[7], (nfeat, nhid), jnp.float32, -stdv_gc, stdv_gc),
    }
    return x, adj, params


if __name__ == "__main__":
    # TODO(synk): Generator (ablation==1 gaussian-noise branch) and Relationv2
    # (ver!=1) are not exercised here (ver=1, ablation=0), so they are omitted.
    key = jax.random.PRNGKey(0)

    # (n, nfeat, nhid, wrapper kwargs). Second config forces small tiles so the
    # multi-tile accumulation path + row/column padding are exercised.
    configs = [
        (8, 32, 16, {}),
        (160, 32, 16, {"max_tm": 64, "max_tk": 128}),
    ]

    for idx, (n, nfeat, nhid, kw) in enumerate(configs):
        x, adj, params = _make_inputs(n, nfeat, nhid, jax.random.fold_in(key, idx))
        for head in (False, True):
            hk, out = transgcn_forward(x, adj, params, head, **kw)
            jax.block_until_ready((hk, out))
            hk_r, out_r = transgcn_ref(x, adj, params, head)
            assert hk.shape == (n, nhid) and out.shape == (n, nfeat)
            assert jnp.allclose(hk, hk_r, rtol=1e-3, atol=1e-2), \
                f"h_k mismatch (n={n}, head={head})"
            assert jnp.allclose(out, out_r, rtol=1e-3, atol=1e-2), \
                f"output mismatch (n={n}, head={head})"

    print("KERNEL_OK")
</pallas_src>

<mosaic_0001>
module attributes {stable_mosaic.version = 11 : i64} {
  func.func @transgcn_kernel(%arg0: i32, %arg1: i32, %arg2: memref<8x128xbf16, #tpu.memory_space<vmem>>, %arg3: memref<128x128xf32, #tpu.memory_space<vmem>>, %arg4: memref<8x128xf32, #tpu.memory_space<vmem>>, %arg5: memref<128x128xf32, #tpu.memory_space<vmem>>, %arg6: memref<128x128xf32, #tpu.memory_space<vmem>>, %arg7: memref<128x128xf32, #tpu.memory_space<vmem>>, %arg8: memref<128x128xf32, #tpu.memory_space<vmem>>, %arg9: memref<1x128xf32, #tpu.memory_space<vmem>>, %arg10: memref<128x128xf32, #tpu.memory_space<vmem>>, %arg11: memref<8x128xf32, #tpu.memory_space<vmem>>, %arg12: memref<8x128xf32, #tpu.memory_space<vmem>>, %arg13: memref<8x128xf32, #tpu.memory_space<vmem>>, %arg14: memref<8x1xf32, #tpu.memory_space<vmem>>, %arg15: memref<8x1xf32, #tpu.memory_space<vmem>>) attributes {dimension_semantics = [#tpu.dimension_semantics<parallel>, #tpu.dimension_semantics<arbitrary>], iteration_bounds = array<i64: 1, 1>, scalar_prefetch = 0 : i64, scratch_operands = 3 : i64, tpu.core_type = #tpu.core_type<tc>, window_params = [{transform_indices = @transform_0, window_bounds = array<i64: 8, 128>}, {transform_indices = @transform_1, window_bounds = array<i64: 128, 128>}, {transform_indices = @transform_2, window_bounds = array<i64: 8, 128>}, {pipeline_mode = #tpu.pipeline_mode<synchronous>, transform_indices = @transform_3, window_bounds = array<i64: 128, 128>}, {pipeline_mode = #tpu.pipeline_mode<synchronous>, transform_indices = @transform_4, window_bounds = array<i64: 128, 128>}, {pipeline_mode = #tpu.pipeline_mode<synchronous>, transform_indices = @transform_5, window_bounds = array<i64: 128, 128>}, {pipeline_mode = #tpu.pipeline_mode<synchronous>, transform_indices = @transform_6, window_bounds = array<i64: 128, 128>}, {pipeline_mode = #tpu.pipeline_mode<synchronous>, transform_indices = @transform_7, window_bounds = array<i64: 1, 128>}, {pipeline_mode = #tpu.pipeline_mode<synchronous>, transform_indices = @transform_8, window_bounds = array<i64: 128, 128>}, {transform_indices = @transform_9, window_bounds = array<i64: 8, 128>}, {transform_indices = @transform_10, window_bounds = array<i64: 8, 128>}]} {
    %c0_i32 = arith.constant 0 : i32
    %0 = arith.cmpi eq, %arg1, %c0_i32 : i32
    %1 = arith.extui %0 : i1 to i32
    %c0_i32_0 = arith.constant 0 : i32
    %2 = arith.cmpi ne, %1, %c0_i32_0 : i32
    scf.if %2 {
      %cst_20 = arith.constant 0.000000e+00 : f32
      %24 = vector.broadcast %cst_20 : f32 to vector<8x128xf32>
      %c0_21 = arith.constant 0 : index
      %c0_22 = arith.constant 0 : index
      %25 = vector.load %arg13[%c0_21, %c0_22] : memref<8x128xf32, #tpu.memory_space<vmem>>, vector<8x128xf32>
      tpu.vector_store %arg13[%c0_21, %c0_22], %24 {strides = array<i32>} : memref<8x128xf32, #tpu.memory_space<vmem>>, vector<8x128xf32>,
      %cst_23 = arith.constant 0.000000e+00 : f32
      %26 = vector.broadcast %cst_23 : f32 to vector<8x1xf32>
      %c0_24 = arith.constant 0 : index
      %c0_25 = arith.constant 0 : index
      %27 = vector.load %arg14[%c0_24, %c0_25] : memref<8x1xf32, #tpu.memory_space<vmem>>, vector<8x1xf32>
      tpu.vector_store %arg14[%c0_24, %c0_25], %26 {strides = array<i32>} : memref<8x1xf32, #tpu.memory_space<vmem>>, vector<8x1xf32>,
      %cst_26 = arith.constant 0.000000e+00 : f32
      %28 = vector.broadcast %cst_26 : f32 to vector<8x1xf32>
      %c0_27 = arith.constant 0 : index
      %c0_28 = arith.constant 0 : index
      %29 = vector.load %arg15[%c0_27, %c0_28] : memref<8x1xf32, #tpu.memory_space<vmem>>, vector<8x1xf32>
      tpu.vector_store %arg15[%c0_27, %c0_28], %28 {strides = array<i32>} : memref<8x1xf32, #tpu.memory_space<vmem>>, vector<8x1xf32>,
    } else {
    }
    %c0 = arith.constant 0 : index
    %c0_1 = arith.constant 0 : index
    %3 = vector.load %arg2[%c0, %c0_1] : memref<8x128xbf16, #tpu.memory_space<vmem>>, vector<8x128xbf16>
    %4 = arith.extf %3 : vector<8x128xbf16> to vector<8x128xf32>
    %c0_2 = arith.constant 0 : index
    %c0_3 = arith.constant 0 : index
    %5 = vector.load %arg13[%c0_2, %c0_3] : memref<8x128xf32, #tpu.memory_space<vmem>>, vector<8x128xf32>
    %c0_4 = arith.constant 0 : index
    %c0_5 = arith.constant 0 : index
    %6 = vector.load %arg3[%c0_4, %c0_5] : memref<128x128xf32, #tpu.memory_space<vmem>>, vector<128x128xf32>
    %cst = arith.constant dense<0.000000e+00> : vector<8x128xf32>
    %7 = tpu.matmul %4, %6, %cst {dimension_numbers = #tpu.dot_dimension_numbers<[1], [0], [0], [1], [0, 0, 1, 1], [], []>} : vector<8x128xf32>, vector<128x128xf32>, vector<8x128xf32> -> vector<8x128xf32>
    %8 = arith.addf %5, %7 : vector<8x128xf32>
    %c0_6 = arith.constant 0 : index
    %c0_7 = arith.constant 0 : index
    %9 = vector.load %arg13[%c0_6, %c0_7] : memref<8x128xf32, #tpu.memory_space<vmem>>, vector<8x128xf32>
    tpu.vector_store %arg13[%c0_6, %c0_7], %8 {strides = array<i32>} : memref<8x128xf32, #tpu.memory_space<vmem>>, vector<8x128xf32>,
    %c0_8 = arith.constant 0 : index
    %c0_9 = arith.constant 0 : index
    %10 = vector.load %arg14[%c0_8, %c0_9] : memref<8x1xf32, #tpu.memory_space<vmem>>, vector<8x1xf32>
    %11 = math.absf %4 : vector<8x128xf32>
    %cst_10 = arith.constant dense<0.000000e+00> : vector<8xf32>
    %12 = vector.multi_reduction <add>, %11, %cst_10 [1] : vector<8x128xf32> to vector<8xf32>
    %13 = vector.shape_cast %12 : vector<8xf32> to vector<8x1xf32>
    %14 = arith.addf %10, %13 : vector<8x1xf32>
    %c0_11 = arith.constant 0 : index
    %c0_12 = arith.constant 0 : index
    %15 = vector.load %arg14[%c0_11, %c0_12] : memref<8x1xf32, #tpu.memory_space<vmem>>, vector<8x1xf32>
    tpu.vector_store %arg14[%c0_11, %c0_12], %14 {strides = array<i32>} : memref<8x1xf32, #tpu.memory_space<vmem>>, vector<8x1xf32>,
    %c0_13 = arith.constant 0 : index
    %c0_14 = arith.constant 0 : index
    %16 = vector.load %arg15[%c0_13, %c0_14] : memref<8x1xf32, #tpu.memory_space<vmem>>, vector<8x1xf32>
    %cst_15 = arith.constant dense<0.000000e+00> : vector<8xf32>
    %17 = vector.multi_reduction <add>, %4, %cst_15 [1] : vector<8x128xf32> to vector<8xf32>
    %18 = vector.shape_cast %17 : vector<8xf32> to vector<8x1xf32>
    %19 = arith.addf %16, %18 : vector<8x1xf32>
    %c0_16 = arith.constant 0 : index
    %c0_17 = arith.constant 0 : index
    %20 = vector.load %arg15[%c0_16, %c0_17] : memref<8x1xf32, #tpu.memory_space<vmem>>, vector<8x1xf32>
    tpu.vector_store %arg15[%c0_16, %c0_17], %19 {strides = array<i32>} : memref<8x1xf32, #tpu.memory_space<vmem>>, vector<8x1xf32>,
    %c0_i32_18 = arith.constant 0 : i32
    %21 = arith.cmpi eq, %arg1, %c0_i32_18 : i32
    %22 = arith.extui %21 : i1 to i32
    %c0_i32_19 = arith.constant 0 : i32
    %23 = arith.cmpi ne, %22, %c0_i32_19 : i32
    scf.if %23 {
      %c0_20 = arith.constant 0 : index
      %c0_21 = arith.constant 0 : index
      %24 = vector.load %arg4[%c0_20, %c0_21] : memref<8x128xf32, #tpu.memory_space<vmem>>, vector<8x128xf32>
      %c0_22 = arith.constant 0 : index
      %c0_23 = arith.constant 0 : index
      %25 = vector.load %arg13[%c0_22, %c0_23] : memref<8x128xf32, #tpu.memory_space<vmem>>, vector<8x128xf32>
      %c0_24 = arith.constant 0 : index
      %c0_25 = arith.constant 0 : index
      %26 = vector.load %arg14[%c0_24, %c0_25] : memref<8x1xf32, #tpu.memory_space<vmem>>, vector<8x1xf32>
      %cst_26 = arith.constant 9.99999996E-13 : f32
      %27 = vector.broadcast %cst_26 : f32 to vector<8x1xf32>
      %28 = arith.maximumf %26, %27 : vector<8x1xf32>
      %cst_27 = arith.constant 1.000000e+00 : f32
      %29 = vector.broadcast %cst_27 : f32 to vector<8x1xf32>
      %30 = arith.divf %29, %28 : vector<8x1xf32>
      %31 = vector.broadcast %30 : vector<8x1xf32> to vector<8x128xf32>
      %32 = arith.mulf %25, %31 : vector<8x128xf32>
      %c0_28 = arith.constant 0 : index
      %c0_29 = arith.constant 0 : index
      %33 = vector.load %arg5[%c0_28, %c0_29] : memref<128x128xf32, #tpu.memory_space<vmem>>, vector<128x128xf32>
      %cst_30 = arith.constant dense<0.000000e+00> : vector<8x128xf32>
      %34 = tpu.matmul %24, %33, %cst_30 {dimension_numbers = #tpu.dot_dimension_numbers<[1], [0], [0], [1], [0, 0, 1, 1], [], []>} : vector<8x128xf32>, vector<128x128xf32>, vector<8x128xf32> -> vector<8x128xf32>
      %c0_31 = arith.constant 0 : index
      %c0_32 = arith.constant 0 : index
      %35 = vector.load %arg6[%c0_31, %c0_32] : memref<128x128xf32, #tpu.memory_space<vmem>>, vector<128x128xf32>
      %cst_33 = arith.constant dense<0.000000e+00> : vector<8x128xf32>
      %36 = tpu.matmul %32, %35, %cst_33 {dimension_numbers = #tpu.dot_dimension_numbers<[1], [0], [0], [1], [0, 0, 1, 1], [], []>} : vector<8x128xf32>, vector<128x128xf32>, vector<8x128xf32> -> vector<8x128xf32>
      %37 = arith.addf %34, %36 : vector<8x128xf32>
      %cst_34 = arith.constant 0.000000e+00 : f32
      %38 = vector.broadcast %cst_34 : f32 to vector<8x128xf32>
      %39 = arith.cmpf ogt, %37, %38 : vector<8x128xf32>
      %cst_35 = arith.constant 2.000000e-01 : f32
      %40 = vector.broadcast %cst_35 : f32 to vector<8x128xf32>
      %41 = arith.mulf %40, %37 : vector<8x128xf32>
      %42 = arith.select %39, %37, %41 : vector<8x128xi1>, vector<8x128xf32>
      %cst_36 = arith.constant 1.000000e+00 : f32
      %43 = vector.broadcast %cst_36 : f32 to vector<8x128xf32>
      %44 = arith.addf %42, %43 : vector<8x128xf32>
      %c0_37 = arith.constant 0 : index
      %c0_38 = arith.constant 0 : index
      %45 = vector.load %arg7[%c0_37, %c0_38] : memref<128x128xf32, #tpu.memory_space<vmem>>, vector<128x128xf32>
      %cst_39 = arith.constant dense<0.000000e+00> : vector<8x128xf32>
      %46 = tpu.matmul %24, %45, %cst_39 {dimension_numbers = #tpu.dot_dimension_numbers<[1], [0], [0], [1], [0, 0, 1, 1], [], []>} : vector<8x128xf32>, vector<128x128xf32>, vector<8x128xf32> -> vector<8x128xf32>
      %c0_40 = arith.constant 0 : index
      %c0_41 = arith.constant 0 : index
      %47 = vector.load %arg8[%c0_40, %c0_41] : memref<128x128xf32, #tpu.memory_space<vmem>>, vector<128x128xf32>
      %cst_42 = arith.constant dense<0.000000e+00> : vector<8x128xf32>
      %48 = tpu.matmul %32, %47, %cst_42 {dimension_numbers = #tpu.dot_dimension_numbers<[1], [0], [0], [1], [0, 0, 1, 1], [], []>} : vector<8x128xf32>, vector<128x128xf32>, vector<8x128xf32> -> vector<8x128xf32>
      %49 = arith.addf %46, %48 : vector<8x128xf32>
      %cst_43 = arith.constant 0.000000e+00 : f32
      %50 = vector.broadcast %cst_43 : f32 to vector<8x128xf32>
      %51 = arith.cmpf ogt, %49, %50 : vector<8x128xf32>
      %cst_44 = arith.constant 2.000000e-01 : f32
      %52 = vector.broadcast %cst_44 : f32 to vector<8x128xf32>
      %53 = arith.mulf %52, %49 : vector<8x128xf32>
      %54 = arith.select %51, %49, %53 : vector<8x128xi1>, vector<8x128xf32>
      %c0_45 = arith.constant 0 : index
      %c0_46 = arith.constant 0 : index
      %55 = vector.load %arg9[%c0_45, %c0_46] : memref<1x128xf32, #tpu.memory_space<vmem>>, vector<1x128xf32>
      %56 = vector.broadcast %55 : vector<1x128xf32> to vector<8x128xf32>
      %57 = arith.mulf %44, %56 : vector<8x128xf32>
      %58 = arith.addf %57, %54 : vector<8x128xf32>
      %59 = arith.addf %24, %58 : vector<8x128xf32>
      %60 = arith.subf %59, %32 : vector<8x128xf32>
      %c0_47 = arith.constant 0 : index
      %c0_48 = arith.constant 0 : index
      %61 = vector.load %arg12[%c0_47, %c0_48] : memref<8x128xf32, #tpu.memory_space<vmem>>, vector<8x128xf32>
      tpu.vector_store %arg12[%c0_47, %c0_48], %60 {strides = array<i32>} : memref<8x128xf32, #tpu.memory_space<vmem>>, vector<8x128xf32>,
      %c0_49 = arith.constant 0 : index
      %c0_50 = arith.constant 0 : index
      %62 = vector.load %arg10[%c0_49, %c0_50] : memref<128x128xf32, #tpu.memory_space<vmem>>, vector<128x128xf32>
      %c0_51 = arith.constant 0 : index
      %c0_52 = arith.constant 0 : index
      %63 = vector.load %arg15[%c0_51, %c0_52] : memref<8x1xf32, #tpu.memory_space<vmem>>, vector<8x1xf32>
      %cst_53 = arith.constant 1.000000e+00 : f32
      %64 = vector.broadcast %cst_53 : f32 to vector<8x1xf32>
      %65 = arith.addf %63, %64 : vector<8x1xf32>
      %cst_54 = arith.constant 1.000000e+00 : f32
      %66 = vector.broadcast %cst_54 : f32 to vector<8x1xf32>
      %67 = arith.addf %65, %66 : vector<8x1xf32>
      %cst_55 = arith.constant 1.000000e+00 : f32
      %68 = vector.broadcast %cst_55 : f32 to vector<8x1xf32>
      %69 = arith.divf %68, %67 : vector<8x1xf32>
      %70 = arith.addf %25, %24 : vector<8x128xf32>
      %71 = arith.addf %70, %60 : vector<8x128xf32>
      %cst_56 = arith.constant dense<0.000000e+00> : vector<8x128xf32>
      %72 = tpu.matmul %71, %62, %cst_56 {dimension_numbers = #tpu.dot_dimension_numbers<[1], [0], [0], [1], [0, 0, 1, 1], [], []>} : vector<8x128xf32>, vector<128x128xf32>, vector<8x128xf32> -> vector<8x128xf32>
      %73 = vector.broadcast %69 : vector<8x1xf32> to vector<8x128xf32>
      %74 = arith.mulf %72, %73 : vector<8x128xf32>
      %c0_57 = arith.constant 0 : index
      %c0_58 = arith.constant 0 : index
      %75 = vector.load %arg11[%c0_57, %c0_58] : memref<8x128xf32, #tpu.memory_space<vmem>>, vector<8x128xf32>
      tpu.vector_store %arg11[%c0_57, %c0_58], %74 {strides = array<i32>} : memref<8x128xf32, #tpu.memory_space<vmem>>, vector<8x128xf32>,
    } else {
    }
    return
  }
  func.func @transform_0(%arg0: i32, %arg1: i32) -> (i32, i32) {
    %c0_i32 = arith.constant 0 : i32
    return %arg0, %arg1 : i32, i32
  }
  func.func @transform_1(%arg0: i32, %arg1: i32) -> (i32, i32) {
    %c0_i32 = arith.constant 0 : i32
    %c0_i32_0 = arith.constant 0 : i32
    return %arg1, %c0_i32 : i32, i32
  }
  func.func @transform_2(%arg0: i32, %arg1: i32) -> (i32, i32) {
    %c0_i32 = arith.constant 0 : i32
    %c0_i32_0 = arith.constant 0 : i32
    return %arg0, %c0_i32 : i32, i32
  }
  func.func @transform_3(%arg0: i32, %arg1: i32) -> (i32, i32) {
    %c0_i32 = arith.constant 0 : i32
    %c0_i32_0 = arith.constant 0 : i32
    %c0_i32_1 = arith.constant 0 : i32
    return %c0_i32, %c0_i32_0 : i32, i32
  }
  func.func @transform_4(%arg0: i32, %arg1: i32) -> (i32, i32) {
    %c0_i32 = arith.constant 0 : i32
    %c0_i32_0 = arith.constant 0 : i32
    %c0_i32_1 = arith.constant 0 : i32
    return %c0_i32, %c0_i32_0 : i32, i32
  }
  func.func @transform_5(%arg0: i32, %arg1: i32) -> (i32, i32) {
    %c0_i32 = arith.constant 0 : i32
    %c0_i32_0 = arith.constant 0 : i32
    %c0_i32_1 = arith.constant 0 : i32
    return %c0_i32, %c0_i32_0 : i32, i32
  }
  func.func @transform_6(%arg0: i32, %arg1: i32) -> (i32, i32) {
    %c0_i32 = arith.constant 0 : i32
    %c0_i32_0 = arith.constant 0 : i32
    %c0_i32_1 = arith.constant 0 : i32
    return %c0_i32, %c0_i32_0 : i32, i32
  }
  func.func @transform_7(%arg0: i32, %arg1: i32) -> (i32, i32) {
    %c0_i32 = arith.constant 0 : i32
    %c0_i32_0 = arith.constant 0 : i32
    %c0_i32_1 = arith.constant 0 : i32
    return %c0_i32, %c0_i32_0 : i32, i32
  }
  func.func @transform_8(%arg0: i32, %arg1: i32) -> (i32, i32) {
    %c0_i32 = arith.constant 0 : i32
    %c0_i32_0 = arith.constant 0 : i32
    %c0_i32_1 = arith.constant 0 : i32
    return %c0_i32, %c0_i32_0 : i32, i32
  }
  func.func @transform_9(%arg0: i32, %arg1: i32) -> (i32, i32) {
    %c0_i32 = arith.constant 0 : i32
    %c0_i32_0 = arith.constant 0 : i32
    return %arg0, %c0_i32 : i32, i32
  }
  func.func @transform_10(%arg0: i32, %arg1: i32) -> (i32, i32) {
    %c0_i32 = arith.constant 0 : i32
    %c0_i32_0 = arith.constant 0 : i32
    return %arg0, %c0_i32 : i32, i32
  }
}

</mosaic_0001>

<llo_original>
// kernel: tpu_custom_call.1
$region0: #{tpu_custom_call.1}
  #allocation0 [shape = 'u32[]', space=smem, size = 0x4, offset = 0x4, fixed_abs, tag = 'smem constant byte address 0x4 - core index']
  #allocation1 [shape = 'u32[72,128]{1,0:T(1,128)}', space=vmem, size = 0x9000, scoped, tag = 'internal scratch']
  #allocation2 [shape = 'f32[8,128]{1,0:T(8,128)}', space=vmem, size = 0x1000, scoped, tag = 'scratch operand']
  #allocation3 [shape = 'f32[8,1]{1,0:T(8,128)}', space=vmem, size = 0x1000, scoped, tag = 'scratch operand']
  #allocation4 [shape = 'f32[8,1]{1,0:T(8,128)}', space=vmem, size = 0x1000, scoped, tag = 'scratch operand']
  %s0 = inlined_call_operand.hbm [shape: bf16[8,128], index: 0, kind: input, shape index: {}]
  %s1 = inlined_call_operand.hbm [shape: f32[128,128], index: 1, kind: input, shape index: {}]
  %s2 = inlined_call_operand.hbm [shape: f32[128,128], index: 2, kind: input, shape index: {}]
  %s3 = inlined_call_operand.hbm [shape: f32[128,128], index: 3, kind: input, shape index: {}]
  %s4 = inlined_call_operand.hbm [shape: f32[128,128], index: 4, kind: input, shape index: {}]
  %s5 = inlined_call_operand.hbm [shape: f32[128,128], index: 5, kind: input, shape index: {}]
  %s6 = inlined_call_operand.hbm [shape: f32[128,128], index: 6, kind: input, shape index: {}]
  %s7 = inlined_call_operand.vmem [shape: f32[1,128], index: 7, kind: input, shape index: {}]
  %s8 = inlined_call_operand.hbm [shape: f32[128,128], index: 8, kind: input, shape index: {}]
  %s9 = inlined_call_operand.hbm [shape: f32[8,128], index: 9, kind: output, shape index: {0}]
  %s10 = inlined_call_operand.hbm [shape: f32[8,128], index: 10, kind: output, shape index: {1}]
  %11 = xla_tuple %s9, %s10
  %s12 = sld [smem:[#allocation0]]
  $region94: #{tpu_custom_call.1} parent=0
    _
  %s14 = ssub.s32 1, %s12
  %s15 = scalar_select 0, %s14, %s12
  $region1: #{tpu_custom_call.1} parent=0
    #allocation5 [shape = 'u8[2048]{0}', space=vmem, size = 0x800, scoped, tag = 'input window, operand 0, single buffered']
    #allocation6 [shape = 's32[1]{0}', space=sflag, size = 0x4, scoped, tag = 'scoped memory for tpu_custom_call.1']
    #allocation7 [shape = 's32[1]{0}', space=sflag, size = 0x4, scoped, tag = 'scoped memory for tpu_custom_call.1']
    #allocation8 [shape = 'u8[65536]{0}', space=vmem, size = 0x10000, scoped, tag = 'input window, operand 1, single buffered']
    #allocation9 [shape = 's32[1]{0}', space=sflag, size = 0x4, scoped, tag = 'scoped memory for tpu_custom_call.1']
    #allocation10 [shape = 'u8[4096]{0}', space=vmem, size = 0x1000, scoped, tag = 'input window, operand 2, single buffered']
    #allocation11 [shape = 'u8[65536]{0}', space=vmem, size = 0x10000, scoped, tag = 'input window, operand 3, single buffered']
    #allocation12 [shape = 's32[1]{0}', space=sflag, size = 0x4, scoped, tag = 'scoped memory for tpu_custom_call.1']
    #allocation13 [shape = 'u8[65536]{0}', space=vmem, size = 0x10000, scoped, tag = 'input window, operand 4, single buffered']
    #allocation14 [shape = 'u8[65536]{0}', space=vmem, size = 0x10000, scoped, tag = 'input window, operand 5, single buffered']
    #allocation15 [shape = 's32[1]{0}', space=sflag, size = 0x4, scoped, tag = 'scoped memory for tpu_custom_call.1']
    #allocation16 [shape = 'u8[65536]{0}', space=vmem, size = 0x10000, scoped, tag = 'input window, operand 6, single buffered']
    #allocation17 [shape = 'u8[65536]{0}', space=vmem, size = 0x10000, scoped, tag = 'input window, operand 8, single buffered']
    #allocation18 [shape = 's32[1]{0}', space=sflag, size = 0x4, scoped, tag = 'scoped memory for tpu_custom_call.1']
    #allocation19 [shape = 'u8[4096]{0}', space=vmem, size = 0x1000, scoped, tag = 'output window, operand 0, single buffered']
    #allocation20 [shape = 'u8[4096]{0}', space=vmem, size = 0x1000, scoped, tag = 'output window, operand 1, single buffered']
    #allocation21 [shape = 's32[1]{0}', space=sflag, size = 0x4, scoped, tag = 'scoped memory for tpu_custom_call.1']
    %16 = vsyncpa [#allocation6], 0
    %17 = vsyncpa [#allocation9], 0
    %18 = vsyncpa [#allocation12], 0
    %19 = vsyncpa [#allocation15], 0
    %20 = vsyncpa [#allocation18], 0
    %21 = vsyncpa [#allocation7], 0
    %22 = vsyncpa [#allocation21], 0
    // Predicated region
    $region2: #{tpu_custom_call.1} parent=1 // pred_check
      _
    $region3: #{tpu_custom_call.1} parent=1 // pred_check_branch
      %24 = sbr.rel (0) target = $region5
    $region4: #{tpu_custom_call.1} parent=1 // pred_region
      %26 = vsyncadd [#allocation6], 0
      %s28 = sshll.u32 %s0, 4
      %s29 = int_to_ptr.hbm [resolvable:$true] %s28
      %s30 = sshll.u32 [#allocation5], 4
      %s31 = int_to_ptr.vmem [resolvable:$true] %s30
      %33 = dma.hbm_to_vmem [thread:$0]  %s29, 64, %s31, [#allocation6]
    $region5: #{tpu_custom_call.1} parent=1 // pred_fallthru
      _
    // Predicated region
    $region6: #{tpu_custom_call.1} parent=1 // pred_check
      _
    $region7: #{tpu_custom_call.1} parent=1 // pred_check_branch
      %35 = sbr.rel (0) target = $region9
    $region8: #{tpu_custom_call.1} parent=1 // pred_region
      %37 = vsyncadd [#allocation9], 0
      %s38 = sshll.u32 %s1, 4
      %s39 = int_to_ptr.hbm [resolvable:$true] %s38
      %s40 = sshll.u32 [#allocation8], 4
      %s41 = int_to_ptr.vmem [resolvable:$true] %s40
      %46 = dma.hbm_to_vmem [thread:$0]  %s39, 2048, %s41, [#allocation9], 128, 128, 8
    $region9: #{tpu_custom_call.1} parent=1 // pred_fallthru
      _
    // Predicated region
    $region10: #{tpu_custom_call.1} parent=1 // pred_check
      _
    $region11: #{tpu_custom_call.1} parent=1 // pred_check_branch
      %48 = sbr.rel (0) target = $region13
    $region12: #{tpu_custom_call.1} parent=1 // pred_region
      %50 = vsyncadd [#allocation9], 0
      %s52 = sshll.u32 %s2, 4
      %s53 = int_to_ptr.hbm [resolvable:$true] %s52
      %s54 = sshll.u32 [#allocation10], 4
      %s55 = int_to_ptr.vmem [resolvable:$true] %s54
      %57 = dma.hbm_to_vmem [thread:$0]  %s53, 128, %s55, [#allocation9]
    $region13: #{tpu_custom_call.1} parent=1 // pred_fallthru
      _
    // Predicated region
    $region14: #{tpu_custom_call.1} parent=1 // pred_check
      _
    $region15: #{tpu_custom_call.1} parent=1 // pred_check_branch
      %59 = sbr.rel (0) target = $region17
    $region16: #{tpu_custom_call.1} parent=1 // pred_region
      %61 = vsyncadd [#allocation12], 0
      %s62 = sshll.u32 %s3, 4
      %s63 = int_to_ptr.hbm [resolvable:$true] %s62
      %s64 = sshll.u32 [#allocation11], 4
      %s65 = int_to_ptr.vmem [resolvable:$true] %s64
      %70 = dma.hbm_to_vmem [thread:$0]  %s63, 2048, %s65, [#allocation12], 128, 128, 8
    $region17: #{tpu_custom_call.1} parent=1 // pred_fallthru
      _
    // Predicated region
    $region18: #{tpu_custom_call.1} parent=1 // pred_check
      _
    $region19: #{tpu_custom_call.1} parent=1 // pred_check_branch
      %72 = sbr.rel (0) target = $region21
    $region20: #{tpu_custom_call.1} parent=1 // pred_region
      %74 = vsyncadd [#allocation12], 0
      %s75 = sshll.u32 %s4, 4
      %s76 = int_to_ptr.hbm [resolvable:$true] %s75
      %s77 = sshll.u32 [#allocation13], 4
      %s78 = int_to_ptr.vmem [resolvable:$true] %s77
      %83 = dma.hbm_to_vmem [thread:$0]  %s76, 2048, %s78, [#allocation12], 128, 128, 8
    $region21: #{tpu_custom_call.1} parent=1 // pred_fallthru
      _
    // Predicated region
    $region22: #{tpu_custom_call.1} parent=1 // pred_check
      _
    $region23: #{tpu_custom_call.1} parent=1 // pred_check_branch
      %85 = sbr.rel (0) target = $region25
    $region24: #{tpu_custom_call.1} parent=1 // pred_region
      %87 = vsyncadd [#allocation15], 0
      %s88 = sshll.u32 %s5, 4
      %s89 = int_to_ptr.hbm [resolvable:$true] %s88
      %s90 = sshll.u32 [#allocation14], 4
      %s91 = int_to_ptr.vmem [resolvable:$true] %s90
      %96 = dma.hbm_to_vmem [thread:$0]  %s89, 2048, %s91, [#allocation15], 128, 128, 8
    $region25: #{tpu_custom_call.1} parent=1 // pred_fallthru
      _
    // Predicated region
    $region26: #{tpu_custom_call.1} parent=1 // pred_check
      _
    $region27: #{tpu_custom_call.1} parent=1 // pred_check_branch
      %98 = sbr.rel (0) target = $region29
    $region28: #{tpu_custom_call.1} parent=1 // pred_region
      %100 = vsyncadd [#allocation15], 0
      %s101 = sshll.u32 %s6, 4
      %s102 = int_to_ptr.hbm [resolvable:$true] %s101
      %s103 = sshll.u32 [#allocation16], 4
      %s104 = int_to_ptr.vmem [resolvable:$true] %s103
      %109 = dma.hbm_to_vmem [thread:$0]  %s102, 2048, %s104, [#allocation15], 128, 128, 8
    $region29: #{tpu_custom_call.1} parent=1 // pred_fallthru
      _
    // Predicated region
    $region30: #{tpu_custom_call.1} parent=1 // pred_check
      _
    $region31: #{tpu_custom_call.1} parent=1 // pred_check_branch
      %111 = sbr.rel (0) target = $region33
    $region32: #{tpu_custom_call.1} parent=1 // pred_region
      _
    $region33: #{tpu_custom_call.1} parent=1 // pred_fallthru
      _
    // Predicated region
    $region34: #{tpu_custom_call.1} parent=1 // pred_check
      _
    $region35: #{tpu_custom_call.1} parent=1 // pred_check_branch
      %113 = sbr.rel (0) target = $region37
    $region36: #{tpu_custom_call.1} parent=1 // pred_region
      %115 = vsyncadd [#allocation18], 0
      %s116 = sshll.u32 %s8, 4
      %s117 = int_to_ptr.hbm [resolvable:$true] %s116
      %s118 = sshll.u32 [#allocation17], 4
      %s119 = int_to_ptr.vmem [resolvable:$true] %s118
      %124 = dma.hbm_to_vmem [thread:$0]  %s117, 2048, %s119, [#allocation18], 128, 128, 8
    $region37: #{tpu_custom_call.1} parent=1 // pred_fallthru
      _
    // Predicated region
    $region38: #{tpu_custom_call.1} parent=1 // pred_check
      _
    $region39: #{tpu_custom_call.1} parent=1 // pred_check_branch
      %126 = sbr.rel (0) target = $region41
    $region40: #{tpu_custom_call.1} parent=1 // pred_region
      %128 = dma.done [#allocation6], 64
    $region41: #{tpu_custom_call.1} parent=1 // pred_fallthru
      _
    // Predicated region
    $region42: #{tpu_custom_call.1} parent=1 // pred_check
      _
    $region43: #{tpu_custom_call.1} parent=1 // pred_check_branch
      %130 = sbr.rel (0) target = $region45
    $region44: #{tpu_custom_call.1} parent=1 // pred_region
      %132 = dma.done [#allocation9], 2048
    $region45: #{tpu_custom_call.1} parent=1 // pred_fallthru
      _
    // Predicated region
    $region46: #{tpu_custom_call.1} parent=1 // pred_check
      _
    $region47: #{tpu_custom_call.1} parent=1 // pred_check_branch
      %134 = sbr.rel (0) target = $region49
    $region48: #{tpu_custom_call.1} parent=1 // pred_region
      %136 = dma.done [#allocation9], 128
    $region49: #{tpu_custom_call.1} parent=1 // pred_fallthru
      _
    // Predicated region
    $region50: #{tpu_custom_call.1} parent=1 // pred_check
      _
    $region51: #{tpu_custom_call.1} parent=1 // pred_check_branch
      %138 = sbr.rel (0) target = $region53
    $region52: #{tpu_custom_call.1} parent=1 // pred_region
      %140 = dma.done [#allocation12], 2048
    $region53: #{tpu_custom_call.1} parent=1 // pred_fallthru
      _
    // Predicated region
    $region54: #{tpu_custom_call.1} parent=1 // pred_check
      _
    $region55: #{tpu_custom_call.1} parent=1 // pred_check_branch
      %142 = sbr.rel (0) target = $region57
    $region56: #{tpu_custom_call.1} parent=1 // pred_region
      %144 = dma.done [#allocation12], 2048
    $region57: #{tpu_custom_call.1} parent=1 // pred_fallthru
      _
    // Predicated region
    $region58: #{tpu_custom_call.1} parent=1 // pred_check
      _
    $region59: #{tpu_custom_call.1} parent=1 // pred_check_branch
      %146 = sbr.rel (0) target = $region61
    $region60: #{tpu_custom_call.1} parent=1 // pred_region
      %148 = dma.done [#allocation15], 2048
    $region61: #{tpu_custom_call.1} parent=1 // pred_fallthru
      _
    // Predicated region
    $region62: #{tpu_custom_call.1} parent=1 // pred_check
      _
    $region63: #{tpu_custom_call.1} parent=1 // pred_check_branch
      %150 = sbr.rel (0) target = $region65
    $region64: #{tpu_custom_call.1} parent=1 // pred_region
      %152 = dma.done [#allocation15], 2048
    $region65: #{tpu_custom_call.1} parent=1 // pred_fallthru
      _
    // Predicated region
    $region66: #{tpu_custom_call.1} parent=1 // pred_check
      _
    $region67: #{tpu_custom_call.1} parent=1 // pred_check_branch
      %154 = sbr.rel (0) target = $region69
    $region68: #{tpu_custom_call.1} parent=1 // pred_region
      %156 = dma.done [#allocation18], 2048
    $region69: #{tpu_custom_call.1} parent=1 // pred_fallthru
      _
    %p157 = scmp.eq.s32.totalorder 0, 0
    // Predicated region
    $region70: #{tpu_custom_call.1} parent=1 // pred_check
      %p158 = pneg %p157
    $region71: #{tpu_custom_call.1} parent=1 // pred_check_branch
      %160 = sbr.rel (%p158) target = $region73
    $region72: #{tpu_custom_call.1} parent=1 // pred_region
      %161 = vst [vmem:[#allocation2] sm:$0xff] 0.0
      %vm162 = vcmask 7168
      %163 = vst.msk [vmem:[#allocation3] sm:$0xff] %vm162, 0.0
      %164 = vst.msk [vmem:[#allocation4] sm:$0xff] %vm162, 0.0
    $region73: #{tpu_custom_call.1} parent=1 // pred_fallthru
      _
    %v165 = vld [vmem:[#allocation5] sm:$0xf]
    %v166 = vunpack.c.l.bf16 %v165
    %v167 = vld [vmem:[#allocation2] sm:$0xff]
    %v168 = vld [vmem:[#allocation8] sm:$0xff]
    %v169 = vld [vmem:[#allocation8 + $0x8] sm:$0xff]
    %v170 = vld [vmem:[#allocation8 + $0x10] sm:$0xff]
    %v171 = vld [vmem:[#allocation8 + $0x18] sm:$0xff]
    %v172 = vld [vmem:[#allocation8 + $0x20] sm:$0xff]
    %v173 = vld [vmem:[#allocation8 + $0x28] sm:$0xff]
    %v174 = vld [vmem:[#allocation8 + $0x30] sm:$0xff]
    %v175 = vld [vmem:[#allocation8 + $0x38] sm:$0xff]
    %v176 = vld [vmem:[#allocation8 + $0x40] sm:$0xff]
    %v177 = vld [vmem:[#allocation8 + $0x48] sm:$0xff]
    %v178 = vld [vmem:[#allocation8 + $0x50] sm:$0xff]
    %v179 = vld [vmem:[#allocation8 + $0x58] sm:$0xff]
    %v180 = vld [vmem:[#allocation8 + $0x60] sm:$0xff]
    %v181 = vld [vmem:[#allocation8 + $0x68] sm:$0xff]
    %v182 = vld [vmem:[#allocation8 + $0x70] sm:$0xff]
    %v183 = vld [vmem:[#allocation8 + $0x78] sm:$0xff]
    %184 = vmatpush.msra.mxu0 %v183
    %185 = vmatpush.msra.mxu0 %v182
    %186 = vmatpush.msra.mxu0 %v181
    %187 = vmatpush.msra.mxu0 %v180
    %188 = vmatpush.msra.mxu0 %v179
    %189 = vmatpush.msra.mxu0 %v178
    %190 = vmatpush.msra.mxu0 %v177
    %191 = vmatpush.msra.mxu0 %v176
    %192 = vmatpush.msra.mxu0 %v175
    %193 = vmatpush.msra.mxu0 %v174
    %194 = vmatpush.msra.mxu0 %v173
    %195 = vmatpush.msra.mxu0 %v172
    %196 = vmatpush.msra.mxu0 %v171
    %197 = vmatpush.msra.mxu0 %v170
    %198 = vmatpush.msra.mxu0 %v169
    %199 = vmatpush.msra.mxu0 %v168
    %200 = vmatmul.f32.gmra.mxu0 %v166
    %v201 = vpop.f32.mrf.mxu0
    %v202 = vadd.f32 0.0, %v201
    %203 = vdwg.mxu0
    %v204 = vadd.f32 %v167, %v202
    %205 = vst [vmem:[#allocation2] sm:$0xff] %v204
    %v206 = vld [vmem:[#allocation3] sm:$0xff]
    %v207 = vand.u32 2147483647, %v166
    %208 = vadd.xlane.f32.xlu0 %v207
    %v209 = vpop.xlane.xlu0 %208
    %v210 = vadd.f32 %v206, %v209
    %vm211 = vcmask 7168
    %212 = vst.msk [vmem:[#allocation3] sm:$0xff] %vm211, %v210
    %v213 = vld [vmem:[#allocation4] sm:$0xff]
    %214 = vadd.xlane.f32.xlu0 %v166
    %v215 = vpop.xlane.xlu0 %214
    %v216 = vadd.f32 %v213, %v215
    %217 = vst.msk [vmem:[#allocation4] sm:$0xff] %vm211, %v216
    // Predicated region
    $region74: #{tpu_custom_call.1} parent=1 // pred_check
      %p218 = pneg %p157
    $region75: #{tpu_custom_call.1} parent=1 // pred_check_branch
      %220 = sbr.rel (%p218) target = $region77
    $region76: #{tpu_custom_call.1} parent=1 // pred_region
      %v221 = vld [vmem:[#allocation10] sm:$0xff]
      %v222 = vld [vmem:[#allocation2] sm:$0xff]
      %v223 = vld [vmem:[#allocation3] sm:$0xff]
      %v224 = vmax.f32 %v223, 1e-12
      %v225 = vrcp.pop %v224
      %v226 = vmul.f32 %v224, %v225
      %v227 = vsub.f32 1.0, %v226
      %v228 = vmul.f32 %v225, %v227
      %v229 = vadd.f32 %v225, %v228
      %vm230 = vweird.f32 %v224
      %vm231 = vweird.f32 %v225
      %vm232 = vmor %vm230, %vm231
      %v233 = vsel %vm232, %v225, %v229
      %v234 = vand.u32 2147483647, %v224
      %vm235 = vcmp.eq.f32.partialorder %v234, 8.507059e+37
      %v236 = vand.u32 %v224, 2147483648
      %v237 = vor.u32 1.1754944e-38, %v236
      %v238 = vsel %vm235, %v237, %v233
      %v239 = vmul.f32 1.0, %v238
      %241 = vset.pattern.permute.xlu0 0
      %242 = vperm.xlu0 %241, %v239
      %v243 = vpop.permute.xlu0 %242
      %v245 = vmul.f32 %v222, %v243
      %v246 = vld [vmem:[#allocation11] sm:$0xff]
      %v247 = vld [vmem:[#allocation11 + $0x8] sm:$0xff]
      %v248 = vld [vmem:[#allocation11 + $0x10] sm:$0xff]
      %v249 = vld [vmem:[#allocation11 + $0x18] sm:$0xff]
      %v250 = vld [vmem:[#allocation11 + $0x20] sm:$0xff]
      %v251 = vld [vmem:[#allocation11 + $0x28] sm:$0xff]
      %v252 = vld [vmem:[#allocation11 + $0x30] sm:$0xff]
      %v253 = vld [vmem:[#allocation11 + $0x38] sm:$0xff]
      %v254 = vld [vmem:[#allocation11 + $0x40] sm:$0xff]
      %v255 = vld [vmem:[#allocation11 + $0x48] sm:$0xff]
      %v256 = vld [vmem:[#allocation11 + $0x50] sm:$0xff]
      %v257 = vld [vmem:[#allocation11 + $0x58] sm:$0xff]
      %v258 = vld [vmem:[#allocation11 + $0x60] sm:$0xff]
      %v259 = vld [vmem:[#allocation11 + $0x68] sm:$0xff]
      %v260 = vld [vmem:[#allocation11 + $0x70] sm:$0xff]
      %v261 = vld [vmem:[#allocation11 + $0x78] sm:$0xff]
      %v262 = vld [vmem:[#allocation13] sm:$0xff]
      %v263 = vld [vmem:[#allocation13 + $0x8] sm:$0xff]
      %v264 = vld [vmem:[#allocation13 + $0x10] sm:$0xff]
      %v265 = vld [vmem:[#allocation13 + $0x18] sm:$0xff]
      %v266 = vld [vmem:[#allocation13 + $0x20] sm:$0xff]
      %v267 = vld [vmem:[#allocation13 + $0x28] sm:$0xff]
      %v268 = vld [vmem:[#allocation13 + $0x30] sm:$0xff]
      %v269 = vld [vmem:[#allocation13 + $0x38] sm:$0xff]
      %v270 = vld [vmem:[#allocation13 + $0x40] sm:$0xff]
      %v271 = vld [vmem:[#allocation13 + $0x48] sm:$0xff]
      %v272 = vld [vmem:[#allocation13 + $0x50] sm:$0xff]
      %v273 = vld [vmem:[#allocation13 + $0x58] sm:$0xff]
      %v274 = vld [vmem:[#allocation13 + $0x60] sm:$0xff]
      %v275 = vld [vmem:[#allocation13 + $0x68] sm:$0xff]
      %v276 = vld [vmem:[#allocation13 + $0x70] sm:$0xff]
      %v277 = vld [vmem:[#allocation13 + $0x78] sm:$0xff]
      %278 = vmatpush.msra.mxu0 %v277
      %279 = vmatpush.msra.mxu0 %v276
      %280 = vmatpush.msra.mxu0 %v275
      %281 = vmatpush.msra.mxu0 %v274
      %282 = vmatpush.msra.mxu0 %v273
      %283 = vmatpush.msra.mxu0 %v272
      %284 = vmatpush.msra.mxu0 %v271
      %285 = vmatpush.msra.mxu0 %v270
      %286 = vmatpush.msra.mxu0 %v269
      %287 = vmatpush.msra.mxu0 %v268
      %288 = vmatpush.msra.mxu0 %v267
      %289 = vmatpush.msra.mxu0 %v266
      %290 = vmatpush.msra.mxu0 %v265
      %291 = vmatpush.msra.mxu0 %v264
      %292 = vmatpush.msra.mxu0 %v263
      %293 = vmatpush.msra.mxu0 %v262
      %294 = vmatmul.f32.gmra.mxu0 %v245
      %v295 = vpop.f32.mrf.mxu0
      %v296 = vadd.f32 0.0, %v295
      %297 = vdwg.mxu0
      %298 = vmatpush.msra.mxu0 %v261
      %299 = vmatpush.msra.mxu0 %v260
      %300 = vmatpush.msra.mxu0 %v259
      %301 = vmatpush.msra.mxu0 %v258
      %302 = vmatpush.msra.mxu0 %v257
      %303 = vmatpush.msra.mxu0 %v256
      %304 = vmatpush.msra.mxu0 %v255
      %305 = vmatpush.msra.mxu0 %v254
      %306 = vmatpush.msra.mxu0 %v253
      %307 = vmatpush.msra.mxu0 %v252
      %308 = vmatpush.msra.mxu0 %v251
      %309 = vmatpush.msra.mxu0 %v250
      %310 = vmatpush.msra.mxu0 %v249
      %311 = vmatpush.msra.mxu0 %v248
      %312 = vmatpush.msra.mxu0 %v247
      %313 = vmatpush.msra.mxu0 %v246
      %314 = vmatmul.f32.gmra.mxu0 %v221
      %v315 = vpop.f32.mrf.mxu0
      %v316 = vadd.f32 %v296, %v315
      %317 = vdwg.mxu0
      %vm318 = vcmp.gt.f32.partialorder %v316, 0.0
      %v319 = vmul.f32 %v316, 0.2
      %v320 = vsel %vm318, %v316, %v319
      %v321 = vadd.f32 %v320, 1.0
      %v322 = vld [vmem:[#allocation14] sm:$0xff]
      %v323 = vld [vmem:[#allocation14 + $0x8] sm:$0xff]
      %v324 = vld [vmem:[#allocation14 + $0x10] sm:$0xff]
      %v325 = vld [vmem:[#allocation14 + $0x18] sm:$0xff]
      %v326 = vld [vmem:[#allocation14 + $0x20] sm:$0xff]
      %v327 = vld [vmem:[#allocation14 + $0x28] sm:$0xff]
      %v328 = vld [vmem:[#allocation14 + $0x30] sm:$0xff]
      %v329 = vld [vmem:[#allocation14 + $0x38] sm:$0xff]
      %v330 = vld [vmem:[#allocation14 + $0x40] sm:$0xff]
      %v331 = vld [vmem:[#allocation14 + $0x48] sm:$0xff]
      %v332 = vld [vmem:[#allocation14 + $0x50] sm:$0xff]
      %v333 = vld [vmem:[#allocation14 + $0x58] sm:$0xff]
      %v334 = vld [vmem:[#allocation14 + $0x60] sm:$0xff]
      %v335 = vld [vmem:[#allocation14 + $0x68] sm:$0xff]
      %v336 = vld [vmem:[#allocation14 + $0x70] sm:$0xff]
      %v337 = vld [vmem:[#allocation14 + $0x78] sm:$0xff]
      %v338 = vld [vmem:[#allocation16] sm:$0xff]
      %v339 = vld [vmem:[#allocation16 + $0x8] sm:$0xff]
      %v340 = vld [vmem:[#allocation16 + $0x10] sm:$0xff]
      %v341 = vld [vmem:[#allocation16 + $0x18] sm:$0xff]
      %v342 = vld [vmem:[#allocation16 + $0x20] sm:$0xff]
      %v343 = vld [vmem:[#allocation16 + $0x28] sm:$0xff]
      %v344 = vld [vmem:[#allocation16 + $0x30] sm:$0xff]
      %v345 = vld [vmem:[#allocation16 + $0x38] sm:$0xff]
      %v346 = vld [vmem:[#allocation16 + $0x40] sm:$0xff]
      %v347 = vld [vmem:[#allocation16 + $0x48] sm:$0xff]
      %v348 = vld [vmem:[#allocation16 + $0x50] sm:$0xff]
      %v349 = vld [vmem:[#allocation16 + $0x58] sm:$0xff]
      %v350 = vld [vmem:[#allocation16 + $0x60] sm:$0xff]
      %v351 = vld [vmem:[#allocation16 + $0x68] sm:$0xff]
      %v352 = vld [vmem:[#allocation16 + $0x70] sm:$0xff]
      %v353 = vld [vmem:[#allocation16 + $0x78] sm:$0xff]
      %354 = vmatpush.msra.mxu0 %v353
      %355 = vmatpush.msra.mxu0 %v352
      %356 = vmatpush.msra.mxu0 %v351
      %357 = vmatpush.msra.mxu0 %v350
      %358 = vmatpush.msra.mxu0 %v349
      %359 = vmatpush.msra.mxu0 %v348
      %360 = vmatpush.msra.mxu0 %v347
      %361 = vmatpush.msra.mxu0 %v346
      %362 = vmatpush.msra.mxu0 %v345
      %363 = vmatpush.msra.mxu0 %v344
      %364 = vmatpush.msra.mxu0 %v343
      %365 = vmatpush.msra.mxu0 %v342
      %366 = vmatpush.msra.mxu0 %v341
      %367 = vmatpush.msra.mxu0 %v340
      %368 = vmatpush.msra.mxu0 %v339
      %369 = vmatpush.msra.mxu0 %v338
      %370 = vmatmul.f32.gmra.mxu0 %v245
      %v371 = vpop.f32.mrf.mxu0
      %v372 = vadd.f32 0.0, %v371
      %373 = vdwg.mxu0
      %374 = vmatpush.msra.mxu0 %v337
      %375 = vmatpush.msra.mxu0 %v336
      %376 = vmatpush.msra.mxu0 %v335
      %377 = vmatpush.msra.mxu0 %v334
      %378 = vmatpush.msra.mxu0 %v333
      %379 = vmatpush.msra.mxu0 %v332
      %380 = vmatpush.msra.mxu0 %v331
      %381 = vmatpush.msra.mxu0 %v330
      %382 = vmatpush.msra.mxu0 %v329
      %383 = vmatpush.msra.mxu0 %v328
      %384 = vmatpush.msra.mxu0 %v327
      %385 = vmatpush.msra.mxu0 %v326
      %386 = vmatpush.msra.mxu0 %v325
      %387 = vmatpush.msra.mxu0 %v324
      %388 = vmatpush.msra.mxu0 %v323
      %389 = vmatpush.msra.mxu0 %v322
      %390 = vmatmul.f32.gmra.mxu0 %v221
      %v391 = vpop.f32.mrf.mxu0
      %v392 = vadd.f32 %v372, %v391
      %393 = vdwg.mxu0
      %vm394 = vcmp.gt.f32.partialorder %v392, 0.0
      %v395 = vmul.f32 %v392, 0.2
      %v396 = vsel %vm394, %v392, %v395
      %v397 = vld [vmem:[%s7] sm:$0x1]
      %v399 = vperm.slane %v397, 0
      %v401 = vmul.f32 %v321, %v399
      %v402 = vadd.f32 %v401, %v396
      %v403 = vadd.f32 %v221, %v402
      %v404 = vsub.f32 %v403, %v245
      %405 = vst [vmem:[#allocation20] sm:$0xff] %v404
      %v406 = vld [vmem:[#allocation17] sm:$0xff]
      %v407 = vld [vmem:[#allocation17 + $0x8] sm:$0xff]
      %v408 = vld [vmem:[#allocation17 + $0x10] sm:$0xff]
      %v409 = vld [vmem:[#allocation17 + $0x18] sm:$0xff]
      %v410 = vld [vmem:[#allocation17 + $0x20] sm:$0xff]
      %v411 = vld [vmem:[#allocation17 + $0x28] sm:$0xff]
      %v412 = vld [vmem:[#allocation17 + $0x30] sm:$0xff]
      %v413 = vld [vmem:[#allocation17 + $0x38] sm:$0xff]
      %v414 = vld [vmem:[#allocation17 + $0x40] sm:$0xff]
      %v415 = vld [vmem:[#allocation17 + $0x48] sm:$0xff]
      %v416 = vld [vmem:[#allocation17 + $0x50] sm:$0xff]
      %v417 = vld [vmem:[#allocation17 + $0x58] sm:$0xff]
      %v418 = vld [vmem:[#allocation17 + $0x60] sm:$0xff]
      %v419 = vld [vmem:[#allocation17 + $0x68] sm:$0xff]
      %v420 = vld [vmem:[#allocation17 + $0x70] sm:$0xff]
      %v421 = vld [vmem:[#allocation17 + $0x78] sm:$0xff]
      %v422 = vld [vmem:[#allocation4] sm:$0xff]
      %v423 = vadd.f32 %v422, 1.0
      %v424 = vadd.f32 %v423, 1.0
      %v425 = vrcp.pop %v424
      %v426 = vmul.f32 %v424, %v425
      %v427 = vsub.f32 1.0, %v426
      %v428 = vmul.f32 %v425, %v427
      %v429 = vadd.f32 %v425, %v428
      %vm430 = vweird.f32 %v424
      %vm431 = vweird.f32 %v425
      %vm432 = vmor %vm430, %vm431
      %v433 = vsel %vm432, %v425, %v429
      %v434 = vand.u32 2147483647, %v424
      %vm435 = vcmp.eq.f32.partialorder %v434, 8.507059e+37
      %v436 = vand.u32 %v424, 2147483648
      %v437 = vor.u32 1.1754944e-38, %v436
      %v438 = vsel %vm435, %v437, %v433
      %v439 = vmul.f32 1.0, %v438
      %v440 = vadd.f32 %v222, %v221
      %v441 = vadd.f32 %v440, %v404
      %442 = vmatpush.msra.mxu0 %v421
      %443 = vmatpush.msra.mxu0 %v420
      %444 = vmatpush.msra.mxu0 %v419
      %445 = vmatpush.msra.mxu0 %v418
      %446 = vmatpush.msra.mxu0 %v417
      %447 = vmatpush.msra.mxu0 %v416
      %448 = vmatpush.msra.mxu0 %v415
      %449 = vmatpush.msra.mxu0 %v414
      %450 = vmatpush.msra.mxu0 %v413
      %451 = vmatpush.msra.mxu0 %v412
      %452 = vmatpush.msra.mxu0 %v411
      %453 = vmatpush.msra.mxu0 %v410
      %454 = vmatpush.msra.mxu0 %v409
      %455 = vmatpush.msra.mxu0 %v408
      %456 = vmatpush.msra.mxu0 %v407
      %457 = vmatpush.msra.mxu0 %v406
      %458 = vmatmul.f32.gmra.mxu0 %v441
      %v459 = vpop.f32.mrf.mxu0
      %v460 = vadd.f32 0.0, %v459
      %461 = vdwg.mxu0
      %463 = vset.pattern.permute.xlu0 0
      %464 = vperm.xlu0 %463, %v439
      %v465 = vpop.permute.xlu0 %464
      %v467 = vmul.f32 %v460, %v465
      %468 = vst [vmem:[#allocation19] sm:$0xff] %v467
    $region77: #{tpu_custom_call.1} parent=1 // pred_fallthru
      _
    // Predicated region
    $region78: #{tpu_custom_call.1} parent=1 // pred_check
      _
    $region79: #{tpu_custom_call.1} parent=1 // pred_check_branch
      %470 = sbr.rel (0) target = $region81
    $region80: #{tpu_custom_call.1} parent=1 // pred_region
      %472 = vsyncadd [#allocation7], 0
      %s474 = sshll.u32 [#allocation19], 4
      %s475 = int_to_ptr.vmem [resolvable:$true] %s474
      %s476 = sshll.u32 %s9, 4
      %s477 = int_to_ptr.hbm [resolvable:$true] %s476
      %479 = dma.vmem_to_hbm [thread:$0]  %s475, 128, %s477, [#allocation7]
    $region81: #{tpu_custom_call.1} parent=1 // pred_fallthru
      _
    // Predicated region
    $region82: #{tpu_custom_call.1} parent=1 // pred_check
      _
    $region83: #{tpu_custom_call.1} parent=1 // pred_check_branch
      %481 = sbr.rel (0) target = $region85
    $region84: #{tpu_custom_call.1} parent=1 // pred_region
      %483 = vsyncadd [#allocation21], 0
      %s485 = sshll.u32 [#allocation20], 4
      %s486 = int_to_ptr.vmem [resolvable:$true] %s485
      %s487 = sshll.u32 %s10, 4
      %s488 = int_to_ptr.hbm [resolvable:$true] %s487
      %490 = dma.vmem_to_hbm [thread:$0]  %s486, 128, %s488, [#allocation21]
    $region85: #{tpu_custom_call.1} parent=1 // pred_fallthru
      _
    // Predicated region
    $region86: #{tpu_custom_call.1} parent=1 // pred_check
      _
    $region87: #{tpu_custom_call.1} parent=1 // pred_check_branch
      %492 = sbr.rel (0) target = $region89
    $region88: #{tpu_custom_call.1} parent=1 // pred_region
      %494 = dma.done [#allocation7], 128
    $region89: #{tpu_custom_call.1} parent=1 // pred_fallthru
      _
    // Predicated region
    $region90: #{tpu_custom_call.1} parent=1 // pred_check
      _
    $region91: #{tpu_custom_call.1} parent=1 // pred_check_branch
      %496 = sbr.rel (0) target = $region93
    $region92: #{tpu_custom_call.1} parent=1 // pred_region
      %498 = dma.done [#allocation21], 128
    $region93: #{tpu_custom_call.1} parent=1 // pred_fallthru
      _
    %499 = vsyncpa [#allocation6], 1
    %500 = vsyncpa [#allocation9], 1
    %501 = vsyncpa [#allocation12], 1
    %502 = vsyncpa [#allocation15], 1
    %503 = vsyncpa [#allocation18], 1
    %504 = vsyncpa [#allocation7], 1
    %505 = vsyncpa [#allocation21], 1

</llo_original>
